<compile_context>
chip_gen: v7x
topology: tpu7x:2x2x1
jax: 0.10.0
libtpu: 0.0.40
codegen_flags: <defaults>
</compile_context>

<pallas_src>
import functools

import jax
import jax.numpy as jnp
from jax.experimental import pallas as pl
from jax.experimental.pallas import tpu as pltpu


def _round_up(x, m):
    return (x + m - 1) // m * m


_VMEM_TILE_BUDGET = 40 * 1024 * 1024   # tile-sizing budget: fits v7x's 64 MiB/TC with headroom
_VMEM_LIMIT_BYTES = 48 * 1024 * 1024   # > 16/32 MiB scoped defaults, < v7x physical VMEM


def _sentence_maxpool_kernel(x_ref, wt_ref, b_ref, o_ref, *, tb, seq):
    # x_ref : (tb*seq, D)  pre-flattened batch tile (f32 or bf16)
    # wt_ref: (D, tn)      pre-transposed weight tile (loop-invariant over batch axis)
    # b_ref : (1, tn)      bias (f32)
    # o_ref : (tb, tn)     output tile (f32)
    y = jnp.dot(x_ref[...], wt_ref[...],
                preferred_element_type=jnp.float32)        # one big MXU matmul, f32 acc
    m = jnp.max(y.reshape(tb, seq, -1), axis=1)            # max over the word/seq dim
    # bias + ReLU hoisted after the max (monotone + seq-constant -> identical result);
    # epilogue kept in f32 (tiny VALU work, and v5e has no bf16 VPU path).
    o_ref[...] = jnp.maximum(m + b_ref[...], 0.0).astype(o_ref.dtype)


def _choose_tiles(B, S, D, O_pad, in_itemsize):
    """Pick (tb, tn): tb divides B (no padding), blocks are (8,128)-legal, VMEM fits."""
    # N tile: largest multiple of 128 dividing O_pad, capped at 512 so the weight
    # buffer stays modest; the weight tile is resident across all batch tiles.
    tn = O_pad
    if tn > 512:
        tn = 512
        while O_pad % tn:
            tn -= 128
    sub = 16 if in_itemsize == 2 else 8     # bf16 packs 16 rows per sublane tile

    def legal(tb):
        if tb == B:                          # full-extent blocks are always legal
            return True
        return tb % 8 == 0 and (tb * S) % sub == 0

    def fits(tb):
        rows = tb * S
        need = (2 * rows * D * in_itemsize   # double-buffered x tile
                + D * tn * in_itemsize       # single-buffered weight tile
                + 2 * tn * 4                 # bias
                + rows * tn * 4              # live f32 matmul result
                + 2 * tb * tn * 4)           # double-buffered output tile
        return need <= _VMEM_TILE_BUDGET

    divisors = [d for d in range(B, 0, -1) if B % d == 0]
    cands = [tb for tb in divisors if legal(tb) and fits(tb)]
    if not cands:
        cands = [tb for tb in divisors if legal(tb)] or [B]
    # Prefer >= 2 batch grid steps (v7x megacore sharding) once the per-step matmul
    # already fills the MXU (M = tb*S >= 512); otherwise take the biggest tile.
    for tb in cands:
        if B // tb >= 2 and tb * S >= 512:
            return tb, tn
    return cands[0], tn


def sentence_maxpool(x, weight, bias, *, compute_dtype=None):
    """x: (B, S, D); weight: (O, D) (nn.Linear layout); bias: (O,). Returns (B, O) f32.

    compute_dtype=jnp.bfloat16 casts x/W for the MXU (f32 accumulation & epilogue kept).
    """
    B, S, D = x.shape
    O = weight.shape[0]
    cdt = jnp.dtype(compute_dtype) if compute_dtype is not None else jnp.dtype(x.dtype)
    itemsize = cdt.itemsize

    O_pad = _round_up(O, 128)                       # lane-dense output (unmasked stores)
    tb, tn = _choose_tiles(B, S, D, O_pad, itemsize)

    # Flatten (B, S, D) -> (B*S, D) once in the wrapper (free, contiguous in HBM).
    x2 = x.astype(cdt).reshape(B * S, D)
    wt = jnp.zeros((D, O_pad), cdt).at[:, :O].set(weight.T.astype(cdt))
    b2 = jnp.zeros((1, O_pad), jnp.float32).at[:, :O].set(bias.astype(jnp.float32))

    grid = (O_pad // tn, B // tb)                   # O-tile outermost: weight tile stays
                                                    # resident across the whole batch sweep
    kernel = functools.partial(_sentence_maxpool_kernel, tb=tb, seq=S)

    bytes_accessed = (x2.size * itemsize + wt.size * itemsize
                      + b2.size * 4 + B * O_pad * 4)

    out = pl.pallas_call(
        kernel,
        out_shape=jax.ShapeDtypeStruct((B, O_pad), jnp.float32),
        grid=grid,
        in_specs=[
            pl.BlockSpec((tb * S, D), lambda j, i: (i, 0)),
            # Weight / bias don't vary along the (inner) batch axis: single-buffer
            # them so they don't burn 2x VMEM (frees room for a bigger batch tile).
            pl.BlockSpec((D, tn), lambda j, i: (0, j), pipeline_mode=pl.Buffered(1)),
            pl.BlockSpec((1, tn), lambda j, i: (0, j), pipeline_mode=pl.Buffered(1)),
        ],
        out_specs=pl.BlockSpec((tb, tn), lambda j, i: (i, j)),
        compiler_params=pltpu.CompilerParams(
            dimension_semantics=("parallel", "parallel"),
            vmem_limit_bytes=_VMEM_LIMIT_BYTES),
        cost_estimate=pl.CostEstimate(
            flops=2 * B * S * D * O_pad,
            transcendentals=0,
            bytes_accessed=bytes_accessed),
    )(x2, wt, b2)

    return out[:, :O]


def reference(x, weight, bias):
    y = jnp.einsum("bsd,od->bso", x, weight) + bias
    y = jnp.maximum(y, 0.0)
    return jnp.max(y, axis=1)


if __name__ == "__main__":
    B, S, D, O = 2, 8, 32, 32  # batch, seq(words), word_dimension, output_dim

    key = jax.random.PRNGKey(0)
    kx, kw, kb = jax.random.split(key, 3)

    # Deterministic parameter init (mimics nn.Linear uniform(-1/sqrt(D), 1/sqrt(D)))
    bound = 1.0 / (D ** 0.5)
    weight = jax.random.uniform(kw, (O, D), jnp.float32, -bound, bound)
    bias = jax.random.uniform(kb, (O,), jnp.float32, -bound, bound)
    x = jax.random.normal(kx, (B, S, D), jnp.float32)

    ref = reference(x, weight, bias)

    # f32 path: exact vs. reference.
    out = sentence_maxpool(x, weight, bias)
    jax.block_until_ready(out)
    assert out.shape == (B, O)
    assert jnp.allclose(out, ref, atol=1e-5, rtol=1e-5), "f32 mismatch vs reference"

    # bf16-input fast path (v6e/v7x MXU; f32 accumulation + f32 epilogue).
    out_bf16 = sentence_maxpool(x, weight, bias, compute_dtype=jnp.bfloat16)
    jax.block_until_ready(out_bf16)
    assert jnp.allclose(out_bf16, ref, atol=5e-2, rtol=5e-2), "bf16 mismatch vs reference"

    print("KERNEL_OK")
</pallas_src>

<mosaic_0001>
module attributes {stable_mosaic.version = 11 : i64} {
  func.func @_sentence_maxpool_kernel(%arg0: i32, %arg1: i32, %arg2: memref<16x32xf32, #tpu.memory_space<vmem>>, %arg3: memref<32x128xf32, #tpu.memory_space<vmem>>, %arg4: memref<1x128xf32, #tpu.memory_space<vmem>>, %arg5: memref<2x128xf32, #tpu.memory_space<vmem>>) attributes {dimension_semantics = [#tpu.dimension_semantics<parallel>, #tpu.dimension_semantics<parallel>], iteration_bounds = array<i64: 1, 1>, scalar_prefetch = 0 : i64, scratch_operands = 0 : i64, tpu.core_type = #tpu.core_type<tc>, window_params = [{transform_indices = @transform_0, window_bounds = array<i64: 16, 32>}, {pipeline_mode = #tpu.pipeline_mode<synchronous>, transform_indices = @transform_1, window_bounds = array<i64: 32, 128>}, {pipeline_mode = #tpu.pipeline_mode<synchronous>, transform_indices = @transform_2, window_bounds = array<i64: 1, 128>}, {transform_indices = @transform_3, window_bounds = array<i64: 2, 128>}]} {
    %c0 = arith.constant 0 : index
    %c0_0 = arith.constant 0 : index
    %0 = vector.load %arg2[%c0, %c0_0] : memref<16x32xf32, #tpu.memory_space<vmem>>, vector<16x32xf32>
    %c0_1 = arith.constant 0 : index
    %c0_2 = arith.constant 0 : index
    %1 = vector.load %arg3[%c0_1, %c0_2] : memref<32x128xf32, #tpu.memory_space<vmem>>, vector<32x128xf32>
    %cst = arith.constant dense<0.000000e+00> : vector<16x128xf32>
    %2 = tpu.matmul %0, %1, %cst {dimension_numbers = #tpu.dot_dimension_numbers<[1], [0], [0], [1], [0, 0, 1, 1], [], []>} : vector<16x32xf32>, vector<32x128xf32>, vector<16x128xf32> -> vector<16x128xf32>
    %3 = vector.shape_cast %2 : vector<16x128xf32> to vector<2x8x128xf32>
    %cst_3 = arith.constant dense<0xFF800000> : vector<2x128xf32>
    %4 = vector.multi_reduction <maximumf>, %3, %cst_3 [1] : vector<2x8x128xf32> to vector<2x128xf32>
    %c0_4 = arith.constant 0 : index
    %c0_5 = arith.constant 0 : index
    %5 = vector.load %arg4[%c0_4, %c0_5] : memref<1x128xf32, #tpu.memory_space<vmem>>, vector<1x128xf32>
    %6 = vector.broadcast %5 : vector<1x128xf32> to vector<2x128xf32>
    %7 = arith.addf %4, %6 : vector<2x128xf32>
    %cst_6 = arith.constant 0.000000e+00 : f32
    %8 = vector.broadcast %cst_6 : f32 to vector<2x128xf32>
    %9 = arith.maximumf %7, %8 : vector<2x128xf32>
    %c0_7 = arith.constant 0 : index
    %c0_8 = arith.constant 0 : index
    %10 = vector.load %arg5[%c0_7, %c0_8] : memref<2x128xf32, #tpu.memory_space<vmem>>, vector<2x128xf32>
    tpu.vector_store %arg5[%c0_7, %c0_8], %9 {strides = array<i32>} : memref<2x128xf32, #tpu.memory_space<vmem>>, vector<2x128xf32>,
    return
  }
  func.func @transform_0(%arg0: i32, %arg1: i32) -> (i32, i32) {
    %c0_i32 = arith.constant 0 : i32
    %c0_i32_0 = arith.constant 0 : i32
    return %arg1, %c0_i32 : i32, i32
  }
  func.func @transform_1(%arg0: i32, %arg1: i32) -> (i32, i32) {
    %c0_i32 = arith.constant 0 : i32
    %c0_i32_0 = arith.constant 0 : i32
    return %c0_i32, %arg0 : i32, i32
  }
  func.func @transform_2(%arg0: i32, %arg1: i32) -> (i32, i32) {
    %c0_i32 = arith.constant 0 : i32
    %c0_i32_0 = arith.constant 0 : i32
    return %c0_i32, %arg0 : i32, i32
  }
  func.func @transform_3(%arg0: i32, %arg1: i32) -> (i32, i32) {
    %c0_i32 = arith.constant 0 : i32
    return %arg1, %arg0 : i32, i32
  }
}

</mosaic_0001>

<llo_original>
// kernel: tpu_custom_call.1
$region0: #{tpu_custom_call.1}
  #allocation0 [shape = 'u32[]', space=smem, size = 0x4, offset = 0x4, fixed_abs, tag = 'smem constant byte address 0x4 - core index']
  #allocation1 [shape = 'u32[144,128]{1,0:T(1,128)}', space=vmem, size = 0x12000, scoped, tag = 'internal scratch']
  %s0 = inlined_call_operand.hbm [shape: f32[16,32], index: 0, kind: input, shape index: {}]
  %s1 = inlined_call_operand.hbm [shape: f32[32,128], index: 1, kind: input, shape index: {}]
  %s2 = inlined_call_operand.vmem [shape: f32[1,128], index: 2, kind: input, shape index: {}]
  %s3 = inlined_call_operand.hbm [shape: f32[2,128], index: 3, kind: output, shape index: {}]
  %s4 = sld [smem:[#allocation0]]
  $region30: #{tpu_custom_call.1} parent=0
    _
  %s6 = ssub.s32 1, %s4
  %s7 = scalar_select 0, %s6, %s4
  $region1: #{tpu_custom_call.1} parent=0
    #allocation2 [shape = 'u8[8192]{0}', space=vmem, size = 0x2000, scoped, tag = 'input window, operand 0, single buffered']
    #allocation3 [shape = 's32[1]{0}', space=sflag, size = 0x4, scoped, tag = 'scoped memory for tpu_custom_call.1']
    #allocation4 [shape = 's32[1]{0}', space=sflag, size = 0x4, scoped, tag = 'scoped memory for tpu_custom_call.1']
    #allocation5 [shape = 'u8[16384]{0}', space=vmem, size = 0x4000, scoped, tag = 'input window, operand 1, single buffered']
    #allocation6 [shape = 's32[1]{0}', space=sflag, size = 0x4, scoped, tag = 'scoped memory for tpu_custom_call.1']
    #allocation7 [shape = 'u8[1024]{0}', space=vmem, size = 0x400, scoped, tag = 'output window, operand 0, single buffered']
    %8 = vsyncpa [#allocation3], 0
    %9 = vsyncpa [#allocation6], 0
    %10 = vsyncpa [#allocation4], 0
    // Predicated region
    $region2: #{tpu_custom_call.1} parent=1 // pred_check
      _
    $region3: #{tpu_custom_call.1} parent=1 // pred_check_branch
      %12 = sbr.rel (0) target = $region5
    $region4: #{tpu_custom_call.1} parent=1 // pred_region
      %s14 = ssub.s32 256, 256
      %15 = vsyncadd [#allocation3], %s14
      %s16 = sshll.u32 [#allocation2], 4
      %s17 = int_to_ptr.vmem [resolvable:$true] %s16
      %22 = dma.hbm_to_vmem [thread:$0]  %s0, 256, %s17, [#allocation3], 128, 128, 8
    $region5: #{tpu_custom_call.1} parent=1 // pred_fallthru
      _
    // Predicated region
    $region6: #{tpu_custom_call.1} parent=1 // pred_check
      _
    $region7: #{tpu_custom_call.1} parent=1 // pred_check_branch
      %24 = sbr.rel (0) target = $region9
    $region8: #{tpu_custom_call.1} parent=1 // pred_region
      %s26 = ssub.s32 512, 512
      %27 = vsyncadd [#allocation6], %s26
      %s28 = sshll.u32 [#allocation5], 4
      %s29 = int_to_ptr.vmem [resolvable:$true] %s28
      %34 = dma.hbm_to_vmem [thread:$0]  %s1, 512, %s29, [#allocation6], 128, 128, 8
    $region9: #{tpu_custom_call.1} parent=1 // pred_fallthru
      _
    // Predicated region
    $region10: #{tpu_custom_call.1} parent=1 // pred_check
      _
    $region11: #{tpu_custom_call.1} parent=1 // pred_check_branch
      %36 = sbr.rel (0) target = $region13
    $region12: #{tpu_custom_call.1} parent=1 // pred_region
      _
    $region13: #{tpu_custom_call.1} parent=1 // pred_fallthru
      _
    // Predicated region
    $region14: #{tpu_custom_call.1} parent=1 // pred_check
      _
    $region15: #{tpu_custom_call.1} parent=1 // pred_check_branch
      %38 = sbr.rel (0) target = $region17
    $region16: #{tpu_custom_call.1} parent=1 // pred_region
      %39 = dma.done [#allocation3], 256
    $region17: #{tpu_custom_call.1} parent=1 // pred_fallthru
      _
    // Predicated region
    $region18: #{tpu_custom_call.1} parent=1 // pred_check
      _
    $region19: #{tpu_custom_call.1} parent=1 // pred_check_branch
      %41 = sbr.rel (0) target = $region21
    $region20: #{tpu_custom_call.1} parent=1 // pred_region
      %42 = dma.done [#allocation6], 512
    $region21: #{tpu_custom_call.1} parent=1 // pred_fallthru
      _
    %v43 = vld [vmem:[#allocation2] sm:$0xff]
    %v44 = vld [vmem:[#allocation2 + $0x8] sm:$0xff]
    %v45 = vld [vmem:[#allocation5] sm:$0xff]
    %v46 = vld [vmem:[#allocation5 + $0x8] sm:$0xff]
    %v47 = vld [vmem:[#allocation5 + $0x10] sm:$0xff]
    %v48 = vld [vmem:[#allocation5 + $0x18] sm:$0xff]
    %vm49 = vcmask 261120
    %v51 = vsel %vm49, %v43, 0
    %v54 = vsel %vm49, %v44, 0
    %56 = vmatprep.subr.mxu0 0.0
    %57 = vmatpush1.msra.mxu0 %v45
    %58 = vmatprep.subr.mxu0 0.0
    %59 = vmatpush1.msra.mxu0 %v46
    %60 = vmatprep.subr.mxu0 0.0
    %61 = vmatpush1.msra.mxu0 %v47
    %62 = vmatprep.subr.mxu0 0.0
    %63 = vmatpush1.msra.mxu0 %v48
    %64 = vmatprep.subr.mxu0 0.0
    %65 = vmatpush1.msra.mxu0 0.0
    %66 = vmatprep.subr.mxu0 0.0
    %67 = vmatpush1.msra.mxu0 0.0
    %68 = vmatprep.subr.mxu0 0.0
    %69 = vmatpush1.msra.mxu0 0.0
    %70 = vmatprep.subr.mxu0 0.0
    %71 = vmatpush1.msra.mxu0 0.0
    %72 = vmatprep.subr.mxu0 0.0
    %73 = vmatpush1.msra.mxu0 0.0
    %74 = vmatprep.subr.mxu0 0.0
    %75 = vmatpush1.msra.mxu0 0.0
    %76 = vmatprep.subr.mxu0 0.0
    %77 = vmatpush1.msra.mxu0 0.0
    %78 = vmatprep.subr.mxu0 0.0
    %79 = vmatpush1.msra.mxu0 0.0
    %80 = vmatprep.subr.mxu0 0.0
    %81 = vmatpush1.msra.mxu0 0.0
    %82 = vmatprep.subr.mxu0 0.0
    %83 = vmatpush1.msra.mxu0 0.0
    %84 = vmatprep.subr.mxu0 0.0
    %85 = vmatpush1.msra.mxu0 0.0
    %86 = vmatprep.subr.mxu0 0.0
    %87 = vmatpush1.msra.mxu0 0.0
    %88 = vmatprep.subr.mxu0 0.0
    %89 = vmatpush1.msra.mxu0 0.0
    %90 = vmatprep.subr.mxu0 0.0
    %91 = vmatpush1.msra.mxu0 0.0
    %92 = vmatprep.subr.mxu0 0.0
    %93 = vmatpush1.msra.mxu0 0.0
    %94 = vmatprep.subr.mxu0 0.0
    %95 = vmatpush1.msra.mxu0 0.0
    %96 = vmatprep.subr.mxu0 0.0
    %97 = vmatpush1.msra.mxu0 0.0
    %98 = vmatprep.subr.mxu0 0.0
    %99 = vmatpush1.msra.mxu0 0.0
    %100 = vmatprep.subr.mxu0 0.0
    %101 = vmatpush1.msra.mxu0 0.0
    %102 = vmatprep.subr.mxu0 0.0
    %103 = vmatpush1.msra.mxu0 0.0
    %104 = vmatprep.subr.mxu0 0.0
    %105 = vmatpush1.msra.mxu0 0.0
    %106 = vmatprep.subr.mxu0 0.0
    %107 = vmatpush1.msra.mxu0 0.0
    %108 = vmatprep.subr.mxu0 0.0
    %109 = vmatpush1.msra.mxu0 0.0
    %110 = vmatprep.subr.mxu0 0.0
    %111 = vmatpush1.msra.mxu0 0.0
    %112 = vmatprep.subr.mxu0 0.0
    %113 = vmatpush1.msra.mxu0 0.0
    %114 = vmatprep.subr.mxu0 0.0
    %115 = vmatpush1.msra.mxu0 0.0
    %116 = vmatprep.subr.mxu0 0.0
    %117 = vmatpush1.msra.mxu0 0.0
    %118 = vmatprep.subr.mxu0 0.0
    %119 = vmatpush1.msra.mxu0 0.0
    %120 = vmatprep.mubr.f32.mxu0 0.0
    %121 = vmatmul.mubr.f32.gmra.mrb[0].mxu0 %v51
    %v122 = vpop.f32.mrb[0].mxu0
    %v123 = vadd.f32 0.0, %v122
    %v124 = vpop.f32.mrb[0].mxu0
    %125 = vmatprep.mubr.f32.mxu0 0.0
    %126 = vmatmul.mubr.f32.gmra.mrb[0].mxu0 %v54
    %v127 = vpop.f32.mrb[0].mxu0
    %v128 = vadd.f32 0.0, %v127
    %v129 = vpop.f32.mrb[0].mxu0
    %130 = vdwg.mxu0
    %v131 = vrot.slane %v123, 4
    %v132 = vmax.f32 %v123, %v131
    %v133 = vrot.slane %v132, 2
    %v134 = vmax.f32 %v132, %v133
    %v135 = vrot.slane %v134, 1
    %v136 = vmax.f32 %v134, %v135
    %v137 = vrot.slane %v128, 4
    %v138 = vmax.f32 %v128, %v137
    %v139 = vrot.slane %v138, 2
    %v140 = vmax.f32 %v138, %v139
    %v141 = vrot.slane %v140, 1
    %v142 = vmax.f32 %v140, %v141
    %v143 = vld [vmem:[%s2] sm:$0x1]
    %v145 = vlaneseq
    %v146 = vshrl.u32 %v145, 7
    %v147 = vsub.s32 0, %v146
    %v148 = vrot.slane %v143, %v147
    %v150 = vadd.f32 %v136, %v148
    %v151 = vadd.f32 %v142, %v148
    %v152 = vmax.f32 %v150, 0.0
    %v153 = vmax.f32 %v151, 0.0
    %v156 = vrot.slane %v153, 7
    %vm157 = vcmask 1041409
    %v158 = vsel %vm157, %v156, %v152
    %160 = vst [vmem:[#allocation7] sm:$0x3] %v158
    // Predicated region
    $region22: #{tpu_custom_call.1} parent=1 // pred_check
      _
    $region23: #{tpu_custom_call.1} parent=1 // pred_check_branch
      %162 = sbr.rel (0) target = $region25
    $region24: #{tpu_custom_call.1} parent=1 // pred_region
      %s164 = ssub.s32 32, 32
      %165 = vsyncadd [#allocation4], %s164
      %s167 = sshll.u32 [#allocation7], 4
      %s168 = int_to_ptr.vmem [resolvable:$true] %s167
      %170 = dma.vmem_to_hbm [thread:$0]  %s168, 32, %s3, [#allocation4]
    $region25: #{tpu_custom_call.1} parent=1 // pred_fallthru
      _
    // Predicated region
    $region26: #{tpu_custom_call.1} parent=1 // pred_check
      _
    $region27: #{tpu_custom_call.1} parent=1 // pred_check_branch
      %172 = sbr.rel (0) target = $region29
    $region28: #{tpu_custom_call.1} parent=1 // pred_region
      %173 = dma.done [#allocation4], 32
    $region29: #{tpu_custom_call.1} parent=1 // pred_fallthru
      _
    %174 = vsyncpa [#allocation3], 1
    %175 = vsyncpa [#allocation6], 1
    %176 = vsyncpa [#allocation4], 1

</llo_original>
